<compile_context>
chip_gen: v5e
topology: v5e:2x2
jax: 0.10.0
libtpu: 0.0.40
codegen_flags: <defaults>
</compile_context>

<pallas_src>
import functools

import numpy as np
import jax
import jax.numpy as jnp
from jax.experimental import pallas as pl
from jax.experimental.pallas import tpu as pltpu

# ResNet-50 bottleneck configuration: (planes, num_blocks, first_block_stride)
ARCH = [(64, 3, 1), (128, 4, 2), (256, 6, 2), (512, 3, 2)]


def _round_up(x, m):
    return ((x + m - 1) // m) * m


def _m_tile(m):
    """Right-size the M tile: round to sublanes (8), cap at 128."""
    mp = _round_up(m, 8)
    if mp > 128:
        return _round_up(m, 128), 128
    return mp, mp


def _n_tile(n, k):
    """Largest lane-aligned N tile whose (K, TN) bf16 weight block stays <= 4 MiB."""
    if n % 128 != 0:
        return n  # small N (e.g. fc N=10, planes=64): full-N single block
    for tn in (512, 256, 128):
        if n % tn == 0 and k * tn * 2 <= 4 * 1024 * 1024:
            return tn
    return 128


# ---------------------------------------------------------------------------
# Pallas kernels
# ---------------------------------------------------------------------------

def _mm_kernel(x_ref, w_ref, s_ref, b_ref, o_ref, *, relu):
    """out = relu?((x @ w) * scale + bias); bf16 operands, f32 accumulate/epilogue."""
    acc = jnp.dot(x_ref[...], w_ref[...], preferred_element_type=jnp.float32)
    y = acc * s_ref[...] + b_ref[...]
    if relu:
        y = jnp.maximum(y, 0.0)
    o_ref[...] = y.astype(o_ref.dtype)


def _mm_res_kernel(x_ref, w_ref, s_ref, b_ref, r_ref, o_ref):
    """out = relu((x @ w) * scale + bias + residual) -- fused bottleneck tail."""
    acc = jnp.dot(x_ref[...], w_ref[...], preferred_element_type=jnp.float32)
    y = acc * s_ref[...] + b_ref[...] + r_ref[...].astype(jnp.float32)
    o_ref[...] = jnp.maximum(y, 0.0).astype(o_ref.dtype)


def _maxpool_kernel(p00_ref, p01_ref, p10_ref, p11_ref, o_ref):
    """3x3 stride-2 max over 4 parity planes (each (1, oh+1, ow+1, C))."""
    oh, ow = o_ref.shape[1], o_ref.shape[2]
    a = p00_ref[...]
    b = p01_ref[...]
    c = p10_ref[...]
    d = p11_ref[...]
    m = a[:, :oh, :ow, :]
    m = jnp.maximum(m, a[:, :oh, 1:ow + 1, :])
    m = jnp.maximum(m, a[:, 1:oh + 1, :ow, :])
    m = jnp.maximum(m, a[:, 1:oh + 1, 1:ow + 1, :])
    m = jnp.maximum(m, b[:, :oh, :ow, :])
    m = jnp.maximum(m, b[:, 1:oh + 1, :ow, :])
    m = jnp.maximum(m, c[:, :oh, :ow, :])
    m = jnp.maximum(m, c[:, :oh, 1:ow + 1, :])
    m = jnp.maximum(m, d[:, :oh, :ow, :])
    o_ref[...] = m


def _global_avgpool_kernel(x_ref, o_ref):
    acc = jnp.sum(x_ref[...].astype(jnp.float32), axis=1)
    o_ref[...] = (acc * (1.0 / x_ref.shape[1])).astype(o_ref.dtype)


# ---------------------------------------------------------------------------
# Pallas wrappers
# ---------------------------------------------------------------------------

@functools.partial(jax.jit, static_argnames=("relu", "out_dtype"))
def matmul_scale_bias(x, w, scale, bias, residual=None, *, relu, out_dtype=jnp.float32):
    """(M,K)@(K,N) with fused per-column scale/bias (+ReLU, +optional residual add)."""
    M, K = x.shape
    _, N = w.shape
    Mp, TM = _m_tile(M)
    TN = _n_tile(N, K)

    x = x.astype(jnp.bfloat16)
    if Mp != M:
        x = jnp.pad(x, ((0, Mp - M), (0, 0)))

    args = [x, w.astype(jnp.bfloat16), scale, bias]
    in_specs = [
        pl.BlockSpec((TM, K), lambda i, j: (i, 0)),
        pl.BlockSpec((K, TN), lambda i, j: (0, j)),
        pl.BlockSpec((1, TN), lambda i, j: (0, j)),
        pl.BlockSpec((1, TN), lambda i, j: (0, j)),
    ]
    if residual is not None:
        r = residual.astype(jnp.bfloat16)
        if Mp != M:
            r = jnp.pad(r, ((0, Mp - M), (0, 0)))
        args.append(r)
        in_specs.append(pl.BlockSpec((TM, TN), lambda i, j: (i, j)))
        kernel = _mm_res_kernel
    else:
        kernel = functools.partial(_mm_kernel, relu=relu)

    out = pl.pallas_call(
        kernel,
        out_shape=jax.ShapeDtypeStruct((Mp, N), out_dtype),
        grid_spec=pltpu.PrefetchScalarGridSpec(
            num_scalar_prefetch=0,
            grid=(Mp // TM, N // TN),
            in_specs=in_specs,
            out_specs=pl.BlockSpec((TM, TN), lambda i, j: (i, j)),
        ),
        compiler_params=pltpu.CompilerParams(
            dimension_semantics=("parallel", "parallel")),
    )(*args)
    return out[:M] if Mp != M else out


@jax.jit
def maxpool2d_3x3_s2_p1(x):
    """MaxPool2d(kernel=3, stride=2, padding=1) on NHWC via 4 parity planes (no 9x stack)."""
    n, h, w, c = x.shape
    oh = (h + 2 - 3) // 2 + 1
    ow = (w + 2 - 3) // 2 + 1
    hp, wp = 2 * (oh + 1), 2 * (ow + 1)
    xq = jnp.full((n, hp, wp, c), -jnp.inf, x.dtype)
    xq = xq.at[:, 1:1 + h, 1:1 + w, :].set(x)
    p00 = xq[:, 0::2, 0::2, :]
    p01 = xq[:, 0::2, 1::2, :]
    p10 = xq[:, 1::2, 0::2, :]
    p11 = xq[:, 1::2, 1::2, :]
    return pl.pallas_call(
        _maxpool_kernel,
        out_shape=jax.ShapeDtypeStruct((n, oh, ow, c), x.dtype),
        grid_spec=pltpu.PrefetchScalarGridSpec(
            num_scalar_prefetch=0,
            grid=(n,),
            in_specs=[pl.BlockSpec((1, oh + 1, ow + 1, c),
                                   lambda b: (b, 0, 0, 0))] * 4,
            out_specs=pl.BlockSpec((1, oh, ow, c), lambda b: (b, 0, 0, 0)),
        ),
        compiler_params=pltpu.CompilerParams(dimension_semantics=("parallel",)),
    )(p00, p01, p10, p11)


@jax.jit
def global_avg_pool(x):
    """AdaptiveAvgPool2d((1,1)) + flatten: NHWC -> (N, C), bf16 out (fc casts anyway)."""
    n, h, w, c = x.shape
    xr = x.reshape(n, h * w, c)
    return pl.pallas_call(
        _global_avgpool_kernel,
        out_shape=jax.ShapeDtypeStruct((n, c), jnp.bfloat16),
    )(xr)


# ---------------------------------------------------------------------------
# Conv (+BN fold, +optional fused residual) on top of the Pallas matmul
# ---------------------------------------------------------------------------

@functools.partial(jax.jit, static_argnames=("kh", "kw", "stride", "pad", "relu"))
def conv_bn(x, w2d, scale, bias, residual=None, *, kh, kw, stride, pad, relu):
    """Conv2d (no bias) + folded BatchNorm (+ReLU, +optional residual).

    x: NHWC bf16.  w2d: (kh*kw*Cin, Cout) bf16.  residual (if given): NHWC matching output.
    Output: NHWC bf16.
    """
    n, h, wd, c = x.shape
    cout = w2d.shape[1]
    oh = (h + 2 * pad - kh) // stride + 1
    ow = (wd + 2 * pad - kw) // stride + 1
    xb = x.astype(jnp.bfloat16)

    if kh == 1 and kw == 1:
        if stride != 1:
            xb = xb[:, ::stride, ::stride, :]
        patches = xb.reshape(n * oh * ow, c)
    else:
        xp = jnp.pad(xb, ((0, 0), (pad, pad), (pad, pad), (0, 0))) if pad > 0 else xb
        cols = []
        for i in range(kh):
            for j in range(kw):
                cols.append(xp[:, i:i + stride * (oh - 1) + 1:stride,
                                j:j + stride * (ow - 1) + 1:stride, :])
        patches = jnp.concatenate(cols, axis=-1).reshape(n * oh * ow, kh * kw * c)

    res2d = None if residual is None else residual.reshape(n * oh * ow, cout)
    out = matmul_scale_bias(patches, w2d, scale, bias, res2d,
                            relu=relu, out_dtype=jnp.bfloat16)
    return out.reshape(n, oh, ow, cout)


# ---------------------------------------------------------------------------
# ResNet-50 parameters (deterministic synthetic init) and forward
# ---------------------------------------------------------------------------

def init_params(key):
    keys = iter(jax.random.split(key, 512))

    def nk():
        return next(keys)

    def conv_params(kh, kw, cin, cout):
        fan_in = kh * kw * cin
        w = jax.random.normal(nk(), (kh, kw, cin, cout), jnp.float32) * np.sqrt(2.0 / fan_in)
        eps = 1e-5
        gamma = 1.0 + 0.02 * jax.random.normal(nk(), (cout,), jnp.float32)
        beta = 0.02 * jax.random.normal(nk(), (cout,), jnp.float32)
        mean = 0.02 * jax.random.normal(nk(), (cout,), jnp.float32)
        var = jnp.ones((cout,), jnp.float32)
        scale = gamma / jnp.sqrt(var + eps)
        bias = beta - mean * scale
        # Hoisted preprocessing: (K, Cout) bf16 weight, (1, Cout) f32 scale/bias.
        return (w.reshape(kh * kw * cin, cout).astype(jnp.bfloat16),
                scale.reshape(1, cout), bias.reshape(1, cout))

    params = {"conv1": conv_params(7, 7, 3, 64)}

    inplanes = 64
    layers = []
    for planes, blocks, stride in ARCH:
        blocks_p = []
        for b in range(blocks):
            s = stride if b == 0 else 1
            block = {
                "conv1": conv_params(1, 1, inplanes, planes),
                "conv2": conv_params(3, 3, planes, planes),
                "conv3": conv_params(1, 1, planes, planes * 4),
            }
            if s != 1 or inplanes != planes * 4:
                block["down"] = conv_params(1, 1, inplanes, planes * 4)
            blocks_p.append(block)
            inplanes = planes * 4
        layers.append(blocks_p)
    params["layers"] = layers

    num_ftrs = 512 * 4  # resnet50.fc.in_features
    fc_w = jax.random.normal(nk(), (num_ftrs, 10), jnp.float32) * np.sqrt(1.0 / num_ftrs)
    fc_b = 0.02 * jax.random.normal(nk(), (10,), jnp.float32)
    params["fc"] = (fc_w.astype(jnp.bfloat16),
                    jnp.ones((1, 10), jnp.float32),
                    fc_b.reshape(1, 10))
    return params


def bottleneck_forward(x, block, stride):
    w, s, b = block["conv1"]
    out = conv_bn(x, w, s, b, kh=1, kw=1, stride=1, pad=0, relu=True)
    w, s, b = block["conv2"]
    out = conv_bn(out, w, s, b, kh=3, kw=3, stride=stride, pad=1, relu=True)
    if "down" in block:
        w, s, b = block["down"]
        identity = conv_bn(x, w, s, b, kh=1, kw=1, stride=stride, pad=0, relu=False)
    else:
        identity = x
    # conv3 + BN + residual add + ReLU, fused into one Pallas matmul epilogue.
    w, s, b = block["conv3"]
    return conv_bn(out, w, s, b, identity, kh=1, kw=1, stride=1, pad=0, relu=True)


def resnet50_forward(params, x_nchw):
    x = jnp.transpose(x_nchw, (0, 2, 3, 1)).astype(jnp.bfloat16)  # NCHW f32 -> NHWC bf16
    w, s, b = params["conv1"]
    x = conv_bn(x, w, s, b, kh=7, kw=7, stride=2, pad=3, relu=True)   # conv1 + bn1 + relu
    x = maxpool2d_3x3_s2_p1(x)                                    # maxpool
    for (planes, blocks, stride), layer in zip(ARCH, params["layers"]):
        for bi, block in enumerate(layer):                        # layer1..layer4
            x = bottleneck_forward(x, block, stride if bi == 0 else 1)
    x = global_avg_pool(x)                                        # avgpool + flatten
    w, s, b = params["fc"]
    return matmul_scale_bias(x, w, s, b, relu=False,
                             out_dtype=jnp.float32)               # fc (Linear 2048 -> 10)


if __name__ == "__main__":
    key = jax.random.PRNGKey(0)
    pkey, xkey = jax.random.split(key)
    params = init_params(pkey)
    x = jax.random.normal(xkey, (2, 3, 32, 32), jnp.float32)  # NCHW, like the torch module
    out = resnet50_forward(params, x)
    out = jax.block_until_ready(out)
    assert out.shape == (2, 10), out.shape
    assert out.dtype == jnp.float32
    print("KERNEL_OK")
</pallas_src>

<mosaic_0001>
module attributes {stable_mosaic.version = 11 : i64} {
  func.func @_mm_kernel(%arg0: i32, %arg1: i32, %arg2: memref<128x147xbf16, #tpu.memory_space<vmem>>, %arg3: memref<147x64xbf16, #tpu.memory_space<vmem>>, %arg4: memref<1x64xf32, #tpu.memory_space<vmem>>, %arg5: memref<1x64xf32, #tpu.memory_space<vmem>>, %arg6: memref<128x64xbf16, #tpu.memory_space<vmem>>) attributes {dimension_semantics = [#tpu.dimension_semantics<parallel>, #tpu.dimension_semantics<parallel>], iteration_bounds = array<i64: 4, 1>, scalar_prefetch = 0 : i64, scratch_operands = 0 : i64, tpu.core_type = #tpu.core_type<tc>, window_params = [{transform_indices = @transform_0, window_bounds = array<i64: 128, 147>}, {transform_indices = @transform_1, window_bounds = array<i64: 147, 64>}, {transform_indices = @transform_2, window_bounds = array<i64: 1, 64>}, {transform_indices = @transform_3, window_bounds = array<i64: 1, 64>}, {transform_indices = @transform_4, window_bounds = array<i64: 128, 64>}]} {
    %c0 = arith.constant 0 : index
    %c0_0 = arith.constant 0 : index
    %0 = vector.load %arg2[%c0, %c0_0] : memref<128x147xbf16, #tpu.memory_space<vmem>>, vector<128x147xbf16>
    %c0_1 = arith.constant 0 : index
    %c0_2 = arith.constant 0 : index
    %1 = vector.load %arg3[%c0_1, %c0_2] : memref<147x64xbf16, #tpu.memory_space<vmem>>, vector<147x64xbf16>
    %cst = arith.constant dense<0.000000e+00> : vector<128x64xf32>
    %2 = tpu.matmul %0, %1, %cst {dimension_numbers = #tpu.dot_dimension_numbers<[1], [0], [0], [1], [0, 0, 1, 1], [], []>} : vector<128x147xbf16>, vector<147x64xbf16>, vector<128x64xf32> -> vector<128x64xf32>
    %c0_3 = arith.constant 0 : index
    %c0_4 = arith.constant 0 : index
    %3 = vector.load %arg4[%c0_3, %c0_4] : memref<1x64xf32, #tpu.memory_space<vmem>>, vector<1x64xf32>
    %4 = vector.broadcast %3 : vector<1x64xf32> to vector<128x64xf32>
    %5 = arith.mulf %2, %4 : vector<128x64xf32>
    %c0_5 = arith.constant 0 : index
    %c0_6 = arith.constant 0 : index
    %6 = vector.load %arg5[%c0_5, %c0_6] : memref<1x64xf32, #tpu.memory_space<vmem>>, vector<1x64xf32>
    %7 = vector.broadcast %6 : vector<1x64xf32> to vector<128x64xf32>
    %8 = arith.addf %5, %7 : vector<128x64xf32>
    %cst_7 = arith.constant 0.000000e+00 : f32
    %9 = vector.broadcast %cst_7 : f32 to vector<128x64xf32>
    %10 = arith.maximumf %8, %9 : vector<128x64xf32>
    %11 = arith.truncf %10 : vector<128x64xf32> to vector<128x64xbf16>
    %c0_8 = arith.constant 0 : index
    %c0_9 = arith.constant 0 : index
    %12 = vector.load %arg6[%c0_8, %c0_9] : memref<128x64xbf16, #tpu.memory_space<vmem>>, vector<128x64xbf16>
    tpu.vector_store %arg6[%c0_8, %c0_9], %11 {strides = array<i32>} : memref<128x64xbf16, #tpu.memory_space<vmem>>, vector<128x64xbf16>,
    return
  }
  func.func @transform_0(%arg0: i32, %arg1: i32) -> (i32, i32) {
    %c0_i32 = arith.constant 0 : i32
    %c0_i32_0 = arith.constant 0 : i32
    return %arg0, %c0_i32 : i32, i32
  }
  func.func @transform_1(%arg0: i32, %arg1: i32) -> (i32, i32) {
    %c0_i32 = arith.constant 0 : i32
    %c0_i32_0 = arith.constant 0 : i32
    return %c0_i32, %arg1 : i32, i32
  }
  func.func @transform_2(%arg0: i32, %arg1: i32) -> (i32, i32) {
    %c0_i32 = arith.constant 0 : i32
    %c0_i32_0 = arith.constant 0 : i32
    return %c0_i32, %arg1 : i32, i32
  }
  func.func @transform_3(%arg0: i32, %arg1: i32) -> (i32, i32) {
    %c0_i32 = arith.constant 0 : i32
    %c0_i32_0 = arith.constant 0 : i32
    return %c0_i32, %arg1 : i32, i32
  }
  func.func @transform_4(%arg0: i32, %arg1: i32) -> (i32, i32) {
    %c0_i32 = arith.constant 0 : i32
    return %arg0, %arg1 : i32, i32
  }
}

</mosaic_0001>

<llo_original>
// kernel: matmul_scale_bias.1
$region0: #{matmul_scale_bias.1}
  #allocation0 [shape = 'u32[]', space=smem, size = 0x4, offset = 0x4, fixed_abs, tag = 'smem constant byte address 0x4 - core index']
  #allocation1 [shape = 'u32[72,128]{1,0:T(1,128)}', space=vmem, size = 0x9000, scoped, tag = 'internal scratch']
  %s0 = inlined_call_operand.vmem [shape: bf16[512,147], index: 0, kind: input, shape index: {}]
  %s1 = inlined_call_operand.vmem [shape: bf16[147,64], index: 1, kind: input, shape index: {}]
  %s2 = inlined_call_operand.vmem [shape: f32[1,64], index: 2, kind: input, shape index: {}]
  %s3 = inlined_call_operand.vmem [shape: f32[1,64], index: 3, kind: input, shape index: {}]
  %s4 = inlined_call_operand.vmem [shape: bf16[512,64], index: 4, kind: output, shape index: {}]
  %s5 = sld [smem:[#allocation0]]
  $region49: #{matmul_scale_bias.1} parent=0
    _
  %s7 = ssub.s32 1, %s5
  %s8 = scalar_select 0, %s7, %s5
  loop: start=0, step=1, limit=6
  $region2: #{matmul_scale_bias.1} parent=0 // loop_pre_header
    _
  $region3: #{matmul_scale_bias.1} parent=0 // loop_header
    %s10 = sphi 0, %s14
    %p11 = scmp.ge.s32.totalorder %s10, 6
    %s17 = sphi 0, %s29
    %s18 = sphi 0, %s25
    %s19 = sphi 0, %s17
    %s20 = sphi 0, %s18
    %s21 = sphi 0, %s19
    %s22 = sphi 0, %s20
    %s32 = sphi 0, %s34
    %s35 = sphi 0, %s32
    %s36 = sphi 0, %s35
    %s52 = sphi 0, %s36
    %s58 = sphi 0, %s60
    %s61 = sphi 0, %s58
    %s62 = sphi 0, %s61
    %s78 = sphi 0, %s62
    %s84 = sphi 0, %s86
    %s87 = sphi 0, %s84
    %s88 = sphi 0, %s87
    %s104 = sphi 0, %s88
    %s110 = sphi 0, %s112
    %s113 = sphi 0, %s110
    %s114 = sphi 0, %s113
    %s130 = sphi 0, %s114
    %s138 = sphi 0, %s140
    %s141 = sphi 0, %s138
    %s142 = sphi 0, %s141
    %s158 = sphi 0, %s142
  $region4: #{matmul_scale_bias.1} parent=0 // loop_header_branch
    %13 = sbr.rel (%p11) target = $region8
  $region5: #{matmul_scale_bias.1} parent=0 // loop_body
    %s15 = ssub.s32 %s10, 1
    %s16 = ssub.s32 %s10, 2
    %s23 = sadd.s32 1, %s18
    %p24 = scmp.ge.s32.totalorder %s23, 1
    %s25 = scalar_select %p24, 0, %s23
    %s26 = sadd.s32 1, %s17
    %s27 = scalar_select %p24, %s26, %s17
    %p28 = scmp.ge.s32.totalorder %s27, 4
    %s29 = scalar_select %p28, 0, %s27
    %s30 = ssub.s32 %s17, %s29
    %p31 = scmp.eq.s32.totalorder %s30, 0
    %s33 = sadd.s32 %s32, 1
    %s34 = scalar_select %p31, %s32, %s33
    %p37 = pneg %p31
    %p38 = scmp.eq.s32.totalorder %s10, 3
    %p39 = por %p37, %p38
    %p40 = scmp.ne.s32.totalorder %s32, %s35
    %p41 = scmp.eq.s32.totalorder %s10, 0
    %p42 = por %p40, %p41
    %p43 = scmp.ne.s32.totalorder %s32, %s35
    %p44 = scmp.eq.s32.totalorder %s15, 3
    %p45 = por %p43, %p44
    %p46 = scmp.ne.s32.totalorder %s35, %s36
    %p47 = scmp.eq.s32.totalorder %s15, 0
    %p48 = por %p46, %p47
    %p49 = scmp.ne.s32.totalorder %s35, %s36
    %p50 = scmp.eq.s32.totalorder %s16, 3
    %p51 = por %p49, %p50
    %p53 = scmp.ne.s32.totalorder %s36, %s52
    %p54 = scmp.eq.s32.totalorder %s16, 0
    %p55 = por %p53, %p54
    %s56 = ssub.s32 %s18, %s25
    %p57 = scmp.eq.s32.totalorder %s56, 0
    %s59 = sadd.s32 %s58, 1
    %s60 = scalar_select %p57, %s58, %s59
    %p63 = pneg %p57
    %p64 = scmp.eq.s32.totalorder %s10, 3
    %p65 = por %p63, %p64
    %p66 = scmp.ne.s32.totalorder %s58, %s61
    %p67 = scmp.eq.s32.totalorder %s10, 0
    %p68 = por %p66, %p67
    %p69 = scmp.ne.s32.totalorder %s58, %s61
    %p70 = scmp.eq.s32.totalorder %s15, 3
    %p71 = por %p69, %p70
    %p72 = scmp.ne.s32.totalorder %s61, %s62
    %p73 = scmp.eq.s32.totalorder %s15, 0
    %p74 = por %p72, %p73
    %p75 = scmp.ne.s32.totalorder %s61, %s62
    %p76 = scmp.eq.s32.totalorder %s16, 3
    %p77 = por %p75, %p76
    %p79 = scmp.ne.s32.totalorder %s62, %s78
    %p80 = scmp.eq.s32.totalorder %s16, 0
    %p81 = por %p79, %p80
    %s82 = ssub.s32 %s18, %s25
    %p83 = scmp.eq.s32.totalorder %s82, 0
    %s85 = sadd.s32 %s84, 1
    %s86 = scalar_select %p83, %s84, %s85
    %p89 = pneg %p83
    %p90 = scmp.eq.s32.totalorder %s10, 3
    %p91 = por %p89, %p90
    %p92 = scmp.ne.s32.totalorder %s84, %s87
    %p93 = scmp.eq.s32.totalorder %s10, 0
    %p94 = por %p92, %p93
    %p95 = scmp.ne.s32.totalorder %s84, %s87
    %p96 = scmp.eq.s32.totalorder %s15, 3
    %p97 = por %p95, %p96
    %p98 = scmp.ne.s32.totalorder %s87, %s88
    %p99 = scmp.eq.s32.totalorder %s15, 0
    %p100 = por %p98, %p99
    %p101 = scmp.ne.s32.totalorder %s87, %s88
    %p102 = scmp.eq.s32.totalorder %s16, 3
    %p103 = por %p101, %p102
    %p105 = scmp.ne.s32.totalorder %s88, %s104
    %p106 = scmp.eq.s32.totalorder %s16, 0
    %p107 = por %p105, %p106
    %s108 = ssub.s32 %s18, %s25
    %p109 = scmp.eq.s32.totalorder %s108, 0
    %s111 = sadd.s32 %s110, 1
    %s112 = scalar_select %p109, %s110, %s111
    %p115 = pneg %p109
    %p116 = scmp.eq.s32.totalorder %s10, 3
    %p117 = por %p115, %p116
    %p118 = scmp.ne.s32.totalorder %s110, %s113
    %p119 = scmp.eq.s32.totalorder %s10, 0
    %p120 = por %p118, %p119
    %p121 = scmp.ne.s32.totalorder %s110, %s113
    %p122 = scmp.eq.s32.totalorder %s15, 3
    %p123 = por %p121, %p122
    %p124 = scmp.ne.s32.totalorder %s113, %s114
    %p125 = scmp.eq.s32.totalorder %s15, 0
    %p126 = por %p124, %p125
    %p127 = scmp.ne.s32.totalorder %s113, %s114
    %p128 = scmp.eq.s32.totalorder %s16, 3
    %p129 = por %p127, %p128
    %p131 = scmp.ne.s32.totalorder %s114, %s130
    %p132 = scmp.eq.s32.totalorder %s16, 0
    %p133 = por %p131, %p132
    %s134 = ssub.s32 %s17, %s29
    %s135 = ssub.s32 %s18, %s25
    %s136 = sor.u32 %s134, %s135
    %p137 = scmp.eq.s32.totalorder %s136, 0
    %s139 = sadd.s32 %s138, 1
    %s140 = scalar_select %p137, %s138, %s139
    %p143 = pneg %p137
    %p144 = scmp.eq.s32.totalorder %s10, 3
    %p145 = por %p143, %p144
    %p146 = scmp.ne.s32.totalorder %s138, %s141
    %p147 = scmp.eq.s32.totalorder %s10, 0
    %p148 = por %p146, %p147
    %p149 = scmp.ne.s32.totalorder %s138, %s141
    %p150 = scmp.eq.s32.totalorder %s15, 3
    %p151 = por %p149, %p150
    %p152 = scmp.ne.s32.totalorder %s141, %s142
    %p153 = scmp.eq.s32.totalorder %s15, 0
    %p154 = por %p152, %p153
    %p155 = scmp.ne.s32.totalorder %s141, %s142
    %p156 = scmp.eq.s32.totalorder %s16, 3
    %p157 = por %p155, %p156
    %p159 = scmp.ne.s32.totalorder %s142, %s158
    %p160 = scmp.eq.s32.totalorder %s16, 0
    %p161 = por %p159, %p160
    %p162 = scmp.le.s32.totalorder 1, %s10
    %p163 = scmp.lt.s32.totalorder %s10, 5
    %p164 = pnand %p162, %p163
    %p165 = pneg %p164
    // Predicated region
    $region9: #{matmul_scale_bias.1} parent=5 // pred_check
      _
    $region10: #{matmul_scale_bias.1} parent=5 // pred_check_branch
      %167 = sbr.rel (%p164) target = $region12
    $region11: #{matmul_scale_bias.1} parent=5 // pred_region
      %s168 = ssub.s32 %s10, 1
      // Predicated region
      $region13: #{matmul_scale_bias.1} parent=11 // pred_check
        %p169 = pneg %p74
      $region14: #{matmul_scale_bias.1} parent=11 // pred_check_branch
        %171 = sbr.rel (%p169) target = $region16
      $region15: #{matmul_scale_bias.1} parent=11 // pred_region
        %p172 = scmp.lt.s32.totalorder %s20, 0
        %s173 = scalar_select %p172, %s20, 0
        %s174 = smul.addr %s173, 4
        %s175 = scalar_lea.vmem %s1, %s174
      $region16: #{matmul_scale_bias.1} parent=11 // pred_fallthru
        _
      // Predicated region
      $region17: #{matmul_scale_bias.1} parent=11 // pred_check
        %p176 = pneg %p100
      $region18: #{matmul_scale_bias.1} parent=11 // pred_check_branch
        %178 = sbr.rel (%p176) target = $region20
      $region19: #{matmul_scale_bias.1} parent=11 // pred_region
        %p179 = scmp.lt.s32.totalorder %s20, 0
        %s180 = scalar_select %p179, %s20, 0
        %s181 = scalar_lea.vmem %s2, %s180
      $region20: #{matmul_scale_bias.1} parent=11 // pred_fallthru
        _
      // Predicated region
      $region21: #{matmul_scale_bias.1} parent=11 // pred_check
        %p182 = pneg %p126
      $region22: #{matmul_scale_bias.1} parent=11 // pred_check_branch
        %184 = sbr.rel (%p182) target = $region24
      $region23: #{matmul_scale_bias.1} parent=11 // pred_region
        %p185 = scmp.lt.s32.totalorder %s20, 0
        %s186 = scalar_select %p185, %s20, 0
        %s187 = scalar_lea.vmem %s3, %s186
      $region24: #{matmul_scale_bias.1} parent=11 // pred_fallthru
        _
    $region12: #{matmul_scale_bias.1} parent=5 // pred_fallthru
      _
    %p188 = scmp.lt.s32.totalorder %s10, 4
    // Predicated region
    $region25: #{matmul_scale_bias.1} parent=5 // pred_check
      %p189 = pneg %p188
    $region26: #{matmul_scale_bias.1} parent=5 // pred_check_branch
      %191 = sbr.rel (%p189) target = $region28
    $region27: #{matmul_scale_bias.1} parent=5 // pred_region
      // Predicated region
      $region29: #{matmul_scale_bias.1} parent=27 // pred_check
        %p192 = pneg %p42
      $region30: #{matmul_scale_bias.1} parent=27 // pred_check_branch
        %194 = sbr.rel (%p192) target = $region32
      $region31: #{matmul_scale_bias.1} parent=27 // pred_region
        %s195 = smul.u32 16, %s17
        %p196 = scmp.lt.s32.totalorder %s195, 63
        %s197 = scalar_select %p196, %s195, 63
        %s198 = smul.addr %s197, 2
        %s199 = smul.addr %s198, 4
        %s200 = scalar_lea.vmem %s0, %s199
        %s201 = smul.u32 16, %s17
      $region32: #{matmul_scale_bias.1} parent=27 // pred_fallthru
        _
    $region28: #{matmul_scale_bias.1} parent=5 // pred_fallthru
      _
    %p202 = scmp.le.s32.totalorder 1, %s10
    %p203 = scmp.lt.s32.totalorder %s10, 5
    %p204 = pnand %p202, %p203
    %p205 = pneg %p204
    // Predicated region
    $region33: #{matmul_scale_bias.1} parent=5 // pred_check
      _
    $region34: #{matmul_scale_bias.1} parent=5 // pred_check_branch
      %207 = sbr.rel (%p204) target = $region36
    $region35: #{matmul_scale_bias.1} parent=5 // pred_region
      %s208 = ssub.s32 %s10, 1
      %s209 = smul.u32 16, %s19
      %p210 = scmp.lt.s32.totalorder %s209, 63
      %s211 = scalar_select %p210, %s209, 63
      %s212 = smul.addr %s211, 2
      %s213 = smul.addr %s212, 4
      %s214 = scalar_lea.vmem %s0, %s213
      %p215 = pneg %p48
      %p216 = pneg %p45
      %p217 = scmp.lt.s32.totalorder %s20, 0
      %s218 = scalar_select %p217, %s20, 0
      %s219 = smul.addr %s218, 4
      %s220 = scalar_lea.vmem %s1, %s219
      %p221 = pneg %p74
      %p222 = pneg %p71
      %p223 = scmp.lt.s32.totalorder %s20, 0
      %s224 = scalar_select %p223, %s20, 0
      %s225 = scalar_lea.vmem %s2, %s224
      %p226 = pneg %p100
      %p227 = pneg %p97
      %p228 = scmp.lt.s32.totalorder %s20, 0
      %s229 = scalar_select %p228, %s20, 0
      %s230 = scalar_lea.vmem %s3, %s229
      %p231 = pneg %p126
      %p232 = pneg %p123
      %p233 = pneg %p154
      %p234 = pneg %p151
      %s235 = smul.u32 16, %s19
      %p236 = scmp.lt.s32.totalorder %s235, 63
      %s237 = scalar_select %p236, %s235, 63
      %p238 = scmp.lt.s32.totalorder %s20, 0
      %s239 = scalar_select %p238, %s20, 0
      %s240 = sadd.s32 %s239, %s237
      %s241 = smul.addr %s240, 4
      %s242 = scalar_lea.vmem %s4, %s241
      %s243 = smul.u32 16, %s19
      %p244 = scmp.lt.s32.totalorder %s243, 63
      %s245 = scalar_select %p244, %s243, 63
      %s246 = smul.addr %s245, 2
      %s247 = smul.addr %s246, 4
      %s248 = scalar_lea.vmem %s0, %s247
      %s249 = smul.u32 16, %s19
      %p250 = scmp.lt.s32.totalorder %s20, 0
      %s251 = scalar_select %p250, %s20, 0
      %s252 = smul.addr %s251, 4
      %s253 = scalar_lea.vmem %s1, %s252
      %p254 = scmp.lt.s32.totalorder %s20, 0
      %s255 = scalar_select %p254, %s20, 0
      %s256 = scalar_lea.vmem %s2, %s255
      %p257 = scmp.lt.s32.totalorder %s20, 0
      %s258 = scalar_select %p257, %s20, 0
      %s259 = scalar_lea.vmem %s3, %s258
      %s260 = smul.u32 16, %s19
      %p261 = scmp.lt.s32.totalorder %s260, 63
      %s262 = scalar_select %p261, %s260, 63
      %p263 = scmp.lt.s32.totalorder %s20, 0
      %s264 = scalar_select %p263, %s20, 0
      %s265 = sadd.s32 %s264, %s262
      %s266 = smul.addr %s265, 4
      %s267 = scalar_lea.vmem %s4, %s266
      %s268 = smul.u32 16, %s19
      %v270 = vld [vmem:[%s248] sm:$0xff]
      %v271 = vld [vmem:[%s248 + $0x8] sm:$0xff]
      %v272 = vld [vmem:[%s248 + $0x10] sm:$0xff]
      %v273 = vld [vmem:[%s248 + $0x18] sm:$0xff]
      %v274 = vld [vmem:[%s248 + $0x20] sm:$0xff]
      %v275 = vld [vmem:[%s248 + $0x28] sm:$0xff]
      %v276 = vld [vmem:[%s248 + $0x30] sm:$0xff]
      %v277 = vld [vmem:[%s248 + $0x38] sm:$0xff]
      %v278 = vld [vmem:[%s248 + $0x40] sm:$0xff]
      %v279 = vld [vmem:[%s248 + $0x48] sm:$0xff]
      %v280 = vld [vmem:[%s248 + $0x50] sm:$0xff]
      %v281 = vld [vmem:[%s248 + $0x58] sm:$0xff]
      %v282 = vld [vmem:[%s248 + $0x60] sm:$0xff]
      %v283 = vld [vmem:[%s248 + $0x68] sm:$0xff]
      %v284 = vld [vmem:[%s248 + $0x70] sm:$0xff]
      %v285 = vld [vmem:[%s248 + $0x78] sm:$0xff]
      %v286 = vld [vmem:[%s253] sm:$0xf]
      %v287 = vld [vmem:[%s253 + $0x4] sm:$0xf]
      %v288 = vld [vmem:[%s253 + $0x8] sm:$0xf]
      %v289 = vld [vmem:[%s253 + $0xc] sm:$0xf]
      %v290 = vld [vmem:[%s253 + $0x10] sm:$0xf]
      %v291 = vld [vmem:[%s253 + $0x14] sm:$0xf]
      %v292 = vld [vmem:[%s253 + $0x18] sm:$0xf]
      %v293 = vld [vmem:[%s253 + $0x1c] sm:$0xf]
      %v294 = vld [vmem:[%s253 + $0x20] sm:$0xf]
      %v295 = vld [vmem:[%s253 + $0x24] sm:$0xf]
      %v296 = vld [vmem:[%s253 + $0x28] sm:$0xf]
      %v297 = vld [vmem:[%s253 + $0x2c] sm:$0xf]
      %v298 = vld [vmem:[%s253 + $0x30] sm:$0xf]
      %v299 = vld [vmem:[%s253 + $0x34] sm:$0xf]
      %v300 = vld [vmem:[%s253 + $0x38] sm:$0xf]
      %v301 = vld [vmem:[%s253 + $0x3c] sm:$0xf]
      %v302 = vld [vmem:[%s253 + $0x40] sm:$0xf]
      %v303 = vld [vmem:[%s253 + $0x44] sm:$0xf]
      %v304 = vld [vmem:[%s253 + $0x48] sm:$0x3]
      %v321 = vunpack.c.l.b16 %v270
      %v322 = vunpack.c.h.b16 %v270
      %v323 = vunpack.c.l.b16 %v271
      %v324 = vunpack.c.h.b16 %v271
      %v325 = vunpack.c.l.b16 %v272
      %v326 = vunpack.c.h.b16 %v272
      %v327 = vunpack.c.l.b16 %v273
      %v328 = vunpack.c.h.b16 %v273
      %v329 = vunpack.c.l.b16 %v274
      %v330 = vunpack.c.h.b16 %v274
      %v331 = vunpack.c.l.b16 %v275
      %v332 = vunpack.c.h.b16 %v275
      %v333 = vunpack.c.l.b16 %v276
      %v334 = vunpack.c.h.b16 %v276
      %v335 = vunpack.c.l.b16 %v277
      %v336 = vunpack.c.h.b16 %v277
      %v337 = vunpack.c.l.b16 %v278
      %v338 = vunpack.c.h.b16 %v278
      %v339 = vunpack.c.l.b16 %v279
      %v340 = vunpack.c.h.b16 %v279
      %v341 = vunpack.c.l.b16 %v280
      %v342 = vunpack.c.h.b16 %v280
      %v343 = vunpack.c.l.b16 %v281
      %v344 = vunpack.c.h.b16 %v281
      %v345 = vunpack.c.l.b16 %v282
      %v346 = vunpack.c.h.b16 %v282
      %v347 = vunpack.c.l.b16 %v283
      %v348 = vunpack.c.h.b16 %v283
      %v349 = vunpack.c.l.b16 %v284
      %v350 = vunpack.c.h.b16 %v284
      %v351 = vunpack.c.l.b16 %v285
      %v352 = vunpack.c.h.b16 %v285
      %v353 = vpack.c.b16 %v323, %v321
      %v354 = vpack.c.b16 %v324, %v322
      %v355 = vpack.c.b16 %v327, %v325
      %v356 = vpack.c.b16 %v328, %v326
      %v357 = vpack.c.b16 %v331, %v329
      %v358 = vpack.c.b16 %v332, %v330
      %v359 = vpack.c.b16 %v335, %v333
      %v360 = vpack.c.b16 %v336, %v334
      %v361 = vpack.c.b16 %v339, %v337
      %v362 = vpack.c.b16 %v340, %v338
      %v363 = vpack.c.b16 %v343, %v341
      %v364 = vpack.c.b16 %v344, %v342
      %v365 = vpack.c.b16 %v347, %v345
      %v366 = vpack.c.b16 %v348, %v346
      %v367 = vpack.c.b16 %v351, %v349
      %v368 = vpack.c.b16 %v352, %v350
      %v396 = vunpack.c.l.b16 %v286
      %v397 = vunpack.c.l.b16 %v287
      %v398 = vunpack.c.l.b16 %v288
      %v399 = vunpack.c.l.b16 %v289
      %v400 = vunpack.c.l.b16 %v290
      %v401 = vunpack.c.l.b16 %v291
      %v402 = vunpack.c.l.b16 %v292
      %v403 = vunpack.c.l.b16 %v293
      %v404 = vunpack.c.l.b16 %v294
      %v405 = vunpack.c.l.b16 %v295
      %v406 = vunpack.c.l.b16 %v296
      %v407 = vunpack.c.l.b16 %v297
      %v408 = vunpack.c.l.b16 %v298
      %v409 = vunpack.c.l.b16 %v299
      %v410 = vunpack.c.l.b16 %v300
      %v411 = vunpack.c.l.b16 %v301
      %v412 = vunpack.c.l.b16 %v302
      %v413 = vunpack.c.l.b16 %v303
      %v414 = vunpack.c.l.b16 %v304
      %v415 = vpack.c.b16 %v397, %v396
      %v416 = vpack.c.b16 %v399, %v398
      %v417 = vpack.c.b16 %v401, %v400
      %v418 = vpack.c.b16 %v403, %v402
      %v419 = vpack.c.b16 %v405, %v404
      %v420 = vpack.c.b16 %v407, %v406
      %v421 = vpack.c.b16 %v409, %v408
      %v422 = vpack.c.b16 %v411, %v410
      %v423 = vpack.c.b16 %v413, %v412
      %v424 = vpack.c.b16 %v414, %v414
      %vm434 = vcmask 154624
      %v436 = vsel %vm434, %v354, 0
      %v439 = vsel %vm434, %v356, 0
      %v442 = vsel %vm434, %v358, 0
      %v445 = vsel %vm434, %v360, 0
      %v448 = vsel %vm434, %v362, 0
      %v451 = vsel %vm434, %v364, 0
      %v454 = vsel %vm434, %v366, 0
      %v457 = vsel %vm434, %v368, 0
      %vm459 = vcmask 1040384
      %vm460 = vcmask 1041408
      %v461 = vsel %vm459, 4294967295, 65535
      %v462 = vsel %vm460, %v461, 0
      %v464 = vand.u32 %v424, %v462
      %466 = vmatpush.bf16.msra.mxu0 %v422
      %467 = vmatpush.bf16.msra.mxu0 %v421
      %468 = vmatpush.bf16.msra.mxu0 %v420
      %469 = vmatpush.bf16.msra.mxu0 %v419
      %470 = vmatpush.bf16.msra.mxu0 %v418
      %471 = vmatpush.bf16.msra.mxu0 %v417
      %472 = vmatpush.bf16.msra.mxu0 %v416
      %473 = vmatpush.bf16.msra.mxu0 %v415
      %474 = vmatmul.bf16.gmra.mxu0 %v353
      %v475 = vpop.f32.mrf.mxu0
      %v476 = vadd.f32 0.0, %v475
      %v477 = vpop.f32.mrf.mxu0
      %v478 = vadd.f32 0.0, %v477
      %479 = vmatmul.bf16.gmra.mxu0 %v355
      %v480 = vpop.f32.mrf.mxu0
      %v481 = vadd.f32 0.0, %v480
      %v482 = vpop.f32.mrf.mxu0
      %v483 = vadd.f32 0.0, %v482
      %484 = vmatmul.bf16.gmra.mxu0 %v357
      %v485 = vpop.f32.mrf.mxu0
      %v486 = vadd.f32 0.0, %v485
      %v487 = vpop.f32.mrf.mxu0
      %v488 = vadd.f32 0.0, %v487
      %489 = vmatmul.bf16.gmra.mxu0 %v359
      %v490 = vpop.f32.mrf.mxu0
      %v491 = vadd.f32 0.0, %v490
      %v492 = vpop.f32.mrf.mxu0
      %v493 = vadd.f32 0.0, %v492
      %494 = vmatmul.bf16.gmra.mxu0 %v361
      %v495 = vpop.f32.mrf.mxu0
      %v496 = vadd.f32 0.0, %v495
      %v497 = vpop.f32.mrf.mxu0
      %v498 = vadd.f32 0.0, %v497
      %499 = vmatmul.bf16.gmra.mxu0 %v363
      %v500 = vpop.f32.mrf.mxu0
      %v501 = vadd.f32 0.0, %v500
      %v502 = vpop.f32.mrf.mxu0
      %v503 = vadd.f32 0.0, %v502
      %504 = vmatmul.bf16.gmra.mxu0 %v365
      %v505 = vpop.f32.mrf.mxu0
      %v506 = vadd.f32 0.0, %v505
      %v507 = vpop.f32.mrf.mxu0
      %v508 = vadd.f32 0.0, %v507
      %509 = vmatmul.bf16.gmra.mxu0 %v367
      %v510 = vpop.f32.mrf.mxu0
      %v511 = vadd.f32 0.0, %v510
      %v512 = vpop.f32.mrf.mxu0
      %v513 = vadd.f32 0.0, %v512
      %514 = vdwg.mxu0
      %515 = vmatpush.bf16.msra.mxu0 0
      %516 = vmatpush.bf16.msra.mxu0 0
      %517 = vmatpush.bf16.msra.mxu0 0
      %518 = vmatpush.bf16.msra.mxu0 0
      %519 = vmatpush.bf16.msra.mxu0 0
      %520 = vmatpush.bf16.msra.mxu0 0
      %521 = vmatpush.bf16.msra.mxu0 %v464
      %522 = vmatpush.bf16.msra.mxu0 %v423
      %523 = vmatmul.bf16.gmra.mxu0 %v436
      %v524 = vpop.f32.mrf.mxu0
      %v525 = vadd.f32 %v476, %v524
      %v526 = vpop.f32.mrf.mxu0
      %v527 = vadd.f32 %v478, %v526
      %528 = vmatmul.bf16.gmra.mxu0 %v439
      %v529 = vpop.f32.mrf.mxu0
      %v530 = vadd.f32 %v481, %v529
      %v531 = vpop.f32.mrf.mxu0
      %v532 = vadd.f32 %v483, %v531
      %533 = vmatmul.bf16.gmra.mxu0 %v442
      %v534 = vpop.f32.mrf.mxu0
      %v535 = vadd.f32 %v486, %v534
      %v536 = vpop.f32.mrf.mxu0
      %v537 = vadd.f32 %v488, %v536
      %538 = vmatmul.bf16.gmra.mxu0 %v445
      %v539 = vpop.f32.mrf.mxu0
      %v540 = vadd.f32 %v491, %v539
      %v541 = vpop.f32.mrf.mxu0
      %v542 = vadd.f32 %v493, %v541
      %543 = vmatmul.bf16.gmra.mxu0 %v448
      %v544 = vpop.f32.mrf.mxu0
      %v545 = vadd.f32 %v496, %v544
      %v546 = vpop.f32.mrf.mxu0
      %v547 = vadd.f32 %v498, %v546
      %548 = vmatmul.bf16.gmra.mxu0 %v451
      %v549 = vpop.f32.mrf.mxu0
      %v550 = vadd.f32 %v501, %v549
      %v551 = vpop.f32.mrf.mxu0
      %v552 = vadd.f32 %v503, %v551
      %553 = vmatmul.bf16.gmra.mxu0 %v454
      %v554 = vpop.f32.mrf.mxu0
      %v555 = vadd.f32 %v506, %v554
      %v556 = vpop.f32.mrf.mxu0
      %v557 = vadd.f32 %v508, %v556
      %558 = vmatmul.bf16.gmra.mxu0 %v457
      %v559 = vpop.f32.mrf.mxu0
      %v560 = vadd.f32 %v511, %v559
      %v561 = vpop.f32.mrf.mxu0
      %v562 = vadd.f32 %v513, %v561
      %563 = vdwg.mxu0
      %v564 = vld [vmem:[%s256] sm:$0x1]
      %v566 = vperm.slane %v564, 0
      %v568 = vmul.f32 %v525, %v566
      %v569 = vmul.f32 %v527, %v566
      %v570 = vmul.f32 %v530, %v566
      %v571 = vmul.f32 %v532, %v566
      %v572 = vmul.f32 %v535, %v566
      %v573 = vmul.f32 %v537, %v566
      %v574 = vmul.f32 %v540, %v566
      %v575 = vmul.f32 %v542, %v566
      %v576 = vmul.f32 %v545, %v566
      %v577 = vmul.f32 %v547, %v566
      %v578 = vmul.f32 %v550, %v566
      %v579 = vmul.f32 %v552, %v566
      %v580 = vmul.f32 %v555, %v566
      %v581 = vmul.f32 %v557, %v566
      %v582 = vmul.f32 %v560, %v566
      %v583 = vmul.f32 %v562, %v566
      %v584 = vld [vmem:[%s259] sm:$0x1]
      %v586 = vperm.slane %v584, 0
      %v588 = vadd.f32 %v568, %v586
      %v589 = vadd.f32 %v569, %v586
      %v590 = vadd.f32 %v570, %v586
      %v591 = vadd.f32 %v571, %v586
      %v592 = vadd.f32 %v572, %v586
      %v593 = vadd.f32 %v573, %v586
      %v594 = vadd.f32 %v574, %v586
      %v595 = vadd.f32 %v575, %v586
      %v596 = vadd.f32 %v576, %v586
      %v597 = vadd.f32 %v577, %v586
      %v598 = vadd.f32 %v578, %v586
      %v599 = vadd.f32 %v579, %v586
      %v600 = vadd.f32 %v580, %v586
      %v601 = vadd.f32 %v581, %v586
      %v602 = vadd.f32 %v582, %v586
      %v603 = vadd.f32 %v583, %v586
      %v604 = vmax.f32 %v588, 0.0
      %v605 = vmax.f32 %v589, 0.0
      %v606 = vmax.f32 %v590, 0.0
      %v607 = vmax.f32 %v591, 0.0
      %v608 = vmax.f32 %v592, 0.0
      %v609 = vmax.f32 %v593, 0.0
      %v610 = vmax.f32 %v594, 0.0
      %v611 = vmax.f32 %v595, 0.0
      %v612 = vmax.f32 %v596, 0.0
      %v613 = vmax.f32 %v597, 0.0
      %v614 = vmax.f32 %v598, 0.0
      %v615 = vmax.f32 %v599, 0.0
      %v616 = vmax.f32 %v600, 0.0
      %v617 = vmax.f32 %v601, 0.0
      %v618 = vmax.f32 %v602, 0.0
      %v619 = vmax.f32 %v603, 0.0
      %v620 = vpack.c.bf16 %v604, %v604
      %v621 = vpack.c.bf16 %v605, %v605
      %v622 = vpack.c.bf16 %v606, %v606
      %v623 = vpack.c.bf16 %v607, %v607
      %v624 = vpack.c.bf16 %v608, %v608
      %v625 = vpack.c.bf16 %v609, %v609
      %v626 = vpack.c.bf16 %v610, %v610
      %v627 = vpack.c.bf16 %v611, %v611
      %v628 = vpack.c.bf16 %v612, %v612
      %v629 = vpack.c.bf16 %v613, %v613
      %v630 = vpack.c.bf16 %v614, %v614
      %v631 = vpack.c.bf16 %v615, %v615
      %v632 = vpack.c.bf16 %v616, %v616
      %v633 = vpack.c.bf16 %v617, %v617
      %v634 = vpack.c.bf16 %v618, %v618
      %v635 = vpack.c.bf16 %v619, %v619
      %vm636 = vcmask 519168
      %637 = vst.msk [vmem:[%s267] sm:$0xf] %vm636, %v620
      %638 = vst.msk [vmem:[%s267 + $0x4] sm:$0xf] %vm636, %v621
      %639 = vst.msk [vmem:[%s267 + $0x8] sm:$0xf] %vm636, %v622
      %640 = vst.msk [vmem:[%s267 + $0xc] sm:$0xf] %vm636, %v623
      %641 = vst.msk [vmem:[%s267 + $0x10] sm:$0xf] %vm636, %v624
      %642 = vst.msk [vmem:[%s267 + $0x14] sm:$0xf] %vm636, %v625
      %643 = vst.msk [vmem:[%s267 + $0x18] sm:$0xf] %vm636, %v626
      %644 = vst.msk [vmem:[%s267 + $0x1c] sm:$0xf] %vm636, %v627
      %645 = vst.msk [vmem:[%s267 + $0x20] sm:$0xf] %vm636, %v628
      %646 = vst.msk [vmem:[%s267 + $0x24] sm:$0xf] %vm636, %v629
      %647 = vst.msk [vmem:[%s267 + $0x28] sm:$0xf] %vm636, %v630
      %648 = vst.msk [vmem:[%s267 + $0x2c] sm:$0xf] %vm636, %v631
      %649 = vst.msk [vmem:[%s267 + $0x30] sm:$0xf] %vm636, %v632
      %650 = vst.msk [vmem:[%s267 + $0x34] sm:$0xf] %vm636, %v633
      %651 = vst.msk [vmem:[%s267 + $0x38] sm:$0xf] %vm636, %v634
      %652 = vst.msk [vmem:[%s267 + $0x3c] sm:$0xf] %vm636, %v635
      %s653 = smul.u32 16, %s19
      %p654 = scmp.lt.s32.totalorder %s653, 63
      %s655 = scalar_select %p654, %s653, 63
      %p656 = scmp.lt.s32.totalorder %s20, 0
      %s657 = scalar_select %p656, %s20, 0
      %s658 = sadd.s32 %s657, %s655
      %s659 = smul.addr %s658, 4
      %s660 = scalar_lea.vmem %s4, %s659
      // Predicated region
      $region37: #{matmul_scale_bias.1} parent=35 // pred_check
        %p661 = pneg %p151
      $region38: #{matmul_scale_bias.1} parent=35 // pred_check_branch
        %663 = sbr.rel (%p661) target = $region40
      $region39: #{matmul_scale_bias.1} parent=35 // pred_region
        %s664 = smul.u32 16, %s19
      $region40: #{matmul_scale_bias.1} parent=35 // pred_fallthru
        _
    $region36: #{matmul_scale_bias.1} parent=5 // pred_fallthru
      _
    %p665 = scmp.le.s32.totalorder 2, %s10
    // Predicated region
    $region41: #{matmul_scale_bias.1} parent=5 // pred_check
      %p666 = pneg %p665
    $region42: #{matmul_scale_bias.1} parent=5 // pred_check_branch
      %668 = sbr.rel (%p666) target = $region44
    $region43: #{matmul_scale_bias.1} parent=5 // pred_region
      %s669 = ssub.s32 %s10, 2
      // Predicated region
      $region45: #{matmul_scale_bias.1} parent=43 // pred_check
        %p670 = pneg %p157
      $region46: #{matmul_scale_bias.1} parent=43 // pred_check_branch
        %672 = sbr.rel (%p670) target = $region48
      $region47: #{matmul_scale_bias.1} parent=43 // pred_region
        %s673 = smul.u32 16, %s21
        %p674 = scmp.lt.s32.totalorder %s673, 63
        %s675 = scalar_select %p674, %s673, 63
        %p676 = scmp.lt.s32.totalorder %s22, 0
        %s677 = scalar_select %p676, %s22, 0
        %s678 = sadd.s32 %s677, %s675
        %s679 = smul.addr %s678, 4
        %s680 = scalar_lea.vmem %s4, %s679
      $region48: #{matmul_scale_bias.1} parent=43 // pred_fallthru
        _
    $region44: #{matmul_scale_bias.1} parent=5 // pred_fallthru
      _
  $region6: #{matmul_scale_bias.1} parent=0 // loop_footer
    %s14 = sadd.s32 1, %s10
  $region7: #{matmul_scale_bias.1} parent=0 // loop_footer_branch
    %9 = sbr.rel target = $region3
  $region8: #{matmul_scale_bias.1} parent=0 // loop_exit
    _

</llo_original>
